<compile_context>
chip_gen: v7x
topology: tpu7x:2x2x1
jax: 0.10.0
libtpu: 0.0.40
codegen_flags: <defaults>
</compile_context>

<pallas_src>
import math

import jax
import jax.numpy as jnp
from jax.experimental import pallas as pl
from jax.experimental.pallas import tpu as pltpu


def _round_up(x, m):
    return ((x + m - 1) // m) * m


def _pick_tile(padded, cap, step, min_tiles=1):
    """Largest multiple-of-`step` tile <= cap that divides `padded` and leaves
    at least `min_tiles` grid steps."""
    best = step
    t = step
    limit = min(cap, padded)
    while t <= limit:
        if padded % t == 0 and padded // t >= min_tiles:
            best = t
        t += step
    return best


def _chip_tiling_budget():
    """Per-generation (tn_cap, tk_cap, vmem_limit_bytes).

    v5e/v6e: 128 MiB physical VMEM -> big tiles amortize the ~0.35us/step
    overhead; raise the scoped limit (v5e default is only 16 MiB).
    v7x: 64 MiB VMEM -> cap the double-buffered working set.
    """
    vmem = 64 << 20
    try:
        info = pltpu.get_tpu_info()
        vmem = int(getattr(info, "vmem_capacity_bytes", vmem))
    except Exception:
        pass
    if vmem >= (100 << 20):            # v5e / v6e (128 MiB VMEM)
        return 1024, 2048, 96 << 20
    return 512, 1024, 48 << 20         # v7x (64 MiB VMEM)


# ----------------------------- Pallas kernels ------------------------------

def _train_fact_kernel(x_ref, wmu_ref, wsig_ref, eout_ref, ein_ref,
                       bmu_ref, bsig_ref, beps_ref, o_ref, acc_ref):
    """Training mode, factorised noise: epsilon rebuilt in-kernel (VPU)."""
    @pl.when(pl.program_id(2) == 0)
    def _():
        acc_ref[...] = jnp.zeros_like(acc_ref)

    # Noise rebuild kept in f32 on the VPU (v5e has no bf16 VPU); only the
    # dot operands are cast to the (possibly bf16) MXU streaming dtype.
    eps = eout_ref[...] * ein_ref[...]                        # (tn,1)*(1,tk) f32
    w = (wmu_ref[...].astype(jnp.float32)
         + wsig_ref[...].astype(jnp.float32) * eps)
    acc_ref[...] += jax.lax.dot_general(
        x_ref[...], w.astype(x_ref.dtype),
        dimension_numbers=(((1,), (1,)), ((), ())),
        preferred_element_type=jnp.float32)

    @pl.when(pl.program_id(2) == pl.num_programs(2) - 1)
    def _():
        b = bmu_ref[...] + bsig_ref[...] * beps_ref[...]      # (1, tn) f32
        o_ref[...] = (acc_ref[...] + b).astype(o_ref.dtype)


def _train_full_kernel(x_ref, wmu_ref, wsig_ref, weps_ref,
                       bmu_ref, bsig_ref, beps_ref, o_ref, acc_ref):
    """Training mode, independent noise: full (out,in) epsilon stream."""
    # TODO(synk): weight_epsilon could be generated per-tile in-kernel
    # (pltpu.prng_seed + pltpu.prng_random_bits + normal transform) to drop
    # one weight-sized HBM stream, at the cost of not matching the host RNG.
    @pl.when(pl.program_id(2) == 0)
    def _():
        acc_ref[...] = jnp.zeros_like(acc_ref)

    w = (wmu_ref[...].astype(jnp.float32)
         + wsig_ref[...].astype(jnp.float32)
         * weps_ref[...].astype(jnp.float32))
    acc_ref[...] += jax.lax.dot_general(
        x_ref[...], w.astype(x_ref.dtype),
        dimension_numbers=(((1,), (1,)), ((), ())),
        preferred_element_type=jnp.float32)

    @pl.when(pl.program_id(2) == pl.num_programs(2) - 1)
    def _():
        b = bmu_ref[...] + bsig_ref[...] * beps_ref[...]
        o_ref[...] = (acc_ref[...] + b).astype(o_ref.dtype)


def _eval_kernel(x_ref, wmu_ref, bmu_ref, o_ref, acc_ref):
    """Eval mode: plain linear."""
    @pl.when(pl.program_id(2) == 0)
    def _():
        acc_ref[...] = jnp.zeros_like(acc_ref)

    acc_ref[...] += jax.lax.dot_general(
        x_ref[...], wmu_ref[...].astype(x_ref.dtype),
        dimension_numbers=(((1,), (1,)), ((), ())),
        preferred_element_type=jnp.float32)

    @pl.when(pl.program_id(2) == pl.num_programs(2) - 1)
    def _():
        o_ref[...] = (acc_ref[...] + bmu_ref[...]).astype(o_ref.dtype)


# -------------------------- parameter preparation ---------------------------

def prepare_noisy_linear_params(params, weight_dtype=jnp.float32):
    """Pad (and optionally downcast) parameters ONCE, outside the forward.

    Per-call jnp.pad of the weight tensors costs a full weight-sized HBM
    round trip before the kernel launches; doing it here (at init / after
    each param update) removes that from the steady-state forward.
    Padding is a no-op when out/in are already multiples of 128.
    """
    out_f, in_f = params["weight_mu"].shape
    Np = _round_up(out_f, 128)
    Kp = _round_up(in_f, 128)

    def pad2(a, rows, cols, dtype):
        a = a.astype(dtype)
        if a.shape == (rows, cols):
            return a
        return jnp.pad(a, ((0, rows - a.shape[0]), (0, cols - a.shape[1])))

    prep = {
        "out_features": out_f,
        "in_features": in_f,
        "weight_mu": pad2(params["weight_mu"], Np, Kp, weight_dtype),
        "weight_sigma": pad2(params["weight_sigma"], Np, Kp, weight_dtype),
        "bias_mu": pad2(params["bias_mu"].reshape(1, -1), 1, Np, jnp.float32),
        "bias_sigma": pad2(params["bias_sigma"].reshape(1, -1), 1, Np,
                           jnp.float32),
        "bias_epsilon": pad2(params["bias_epsilon"].reshape(1, -1), 1, Np,
                             jnp.float32),
    }
    if ("eps_out" in params) and ("eps_in" in params):
        prep["eps_out"] = pad2(params["eps_out"].reshape(-1, 1), Np, 1,
                               jnp.float32)
        prep["eps_in"] = pad2(params["eps_in"].reshape(1, -1), 1, Kp,
                              jnp.float32)
    else:
        prep["weight_epsilon"] = pad2(params["weight_epsilon"], Np, Kp,
                                      weight_dtype)
    return prep


# ------------------------------ Python wrapper ------------------------------

def noisy_linear_forward(x, prep, *, training=True):
    """NoisyLinear forward.  `prep` must come from prepare_noisy_linear_params."""
    batch, in_x = x.shape
    out_f = prep["out_features"]
    in_f = prep["in_features"]
    assert in_x == in_f
    Np, Kp = prep["weight_mu"].shape
    w_dtype = prep["weight_mu"].dtype
    factorised = "eps_out" in prep

    tn_cap, tk_cap, vmem_limit = _chip_tiling_budget()

    # M tile scales with batch (up to 512) so large batches don't re-stream
    # the weight matrix once per small row slab.
    Mp = _round_up(batch, 8)
    tm = _pick_tile(Mp, 512, 8)
    tn = _pick_tile(Np, tn_cap, 128)
    tk = _pick_tile(Kp, tk_cap, 128)
    # v7x megacore: keep >= 2 parallel grid steps when the layer is big enough.
    if (Mp // tm) * (Np // tn) < 2 and Np >= 256:
        tn = _pick_tile(Np, tn_cap, 128, min_tiles=2)
    grid = (Mp // tm, Np // tn, Kp // tk)

    # Only the activation is padded / cast per call (small vs weight stream).
    x_p = x.astype(w_dtype)
    if x_p.shape != (Mp, Kp):
        x_p = jnp.pad(x_p, ((0, Mp - batch), (0, Kp - in_f)))

    x_spec = pl.BlockSpec((tm, tk), lambda i, j, k: (i, k))
    w_spec = pl.BlockSpec((tn, tk), lambda i, j, k: (j, k))
    b_spec = pl.BlockSpec((1, tn), lambda i, j, k: (0, j))
    o_spec = pl.BlockSpec((tm, tn), lambda i, j, k: (i, j))

    out_shape = jax.ShapeDtypeStruct((Mp, Np), x.dtype)
    scratch = [pltpu.VMEM((tm, tn), jnp.float32)]
    cparams = pltpu.CompilerParams(
        dimension_semantics=("parallel", "parallel", "arbitrary"),
        vmem_limit_bytes=vmem_limit)

    wb = jnp.dtype(w_dtype).itemsize
    ob = jnp.dtype(x.dtype).itemsize
    n_m, n_n, _ = grid
    x_stream = Mp * Kp * wb * n_n          # x re-read once per N tile
    w_stream = Np * Kp * wb * n_m          # each weight re-read once per M tile
    o_stream = Mp * Np * ob
    flops = 2 * Mp * Np * Kp

    if not training:
        cost = pl.CostEstimate(
            flops=flops, transcendentals=0,
            bytes_accessed=int(x_stream + w_stream + o_stream + 4 * Np))
        y_p = pl.pallas_call(
            _eval_kernel,
            out_shape=out_shape,
            grid_spec=pltpu.PrefetchScalarGridSpec(
                num_scalar_prefetch=0, grid=grid,
                in_specs=[x_spec, w_spec, b_spec],
                out_specs=o_spec, scratch_shapes=scratch),
            compiler_params=cparams, cost_estimate=cost,
        )(x_p, prep["weight_mu"], prep["bias_mu"])
        return y_p[:batch, :out_f]

    if factorised:
        eout_spec = pl.BlockSpec((tn, 1), lambda i, j, k: (j, 0))
        ein_spec = pl.BlockSpec((1, tk), lambda i, j, k: (0, k))
        cost = pl.CostEstimate(
            flops=flops, transcendentals=0,
            bytes_accessed=int(x_stream + 2 * w_stream + o_stream
                               + 4 * (4 * Np + Kp)))
        y_p = pl.pallas_call(
            _train_fact_kernel,
            out_shape=out_shape,
            grid_spec=pltpu.PrefetchScalarGridSpec(
                num_scalar_prefetch=0, grid=grid,
                in_specs=[x_spec, w_spec, w_spec, eout_spec, ein_spec,
                          b_spec, b_spec, b_spec],
                out_specs=o_spec, scratch_shapes=scratch),
            compiler_params=cparams, cost_estimate=cost,
        )(x_p, prep["weight_mu"], prep["weight_sigma"],
          prep["eps_out"], prep["eps_in"],
          prep["bias_mu"], prep["bias_sigma"], prep["bias_epsilon"])
    else:
        cost = pl.CostEstimate(
            flops=flops, transcendentals=0,
            bytes_accessed=int(x_stream + 3 * w_stream + o_stream + 4 * 3 * Np))
        y_p = pl.pallas_call(
            _train_full_kernel,
            out_shape=out_shape,
            grid_spec=pltpu.PrefetchScalarGridSpec(
                num_scalar_prefetch=0, grid=grid,
                in_specs=[x_spec, w_spec, w_spec, w_spec,
                          b_spec, b_spec, b_spec],
                out_specs=o_spec, scratch_shapes=scratch),
            compiler_params=cparams, cost_estimate=cost,
        )(x_p, prep["weight_mu"], prep["weight_sigma"], prep["weight_epsilon"],
          prep["bias_mu"], prep["bias_sigma"], prep["bias_epsilon"])

    return y_p[:batch, :out_f]


# -------------------- deterministic parameter construction ------------------

def _scale_noise(key, size):
    x = jax.random.normal(key, (size,), dtype=jnp.float32)
    return jnp.sign(x) * jnp.sqrt(jnp.abs(x))


def init_noisy_linear(key, in_features, out_features, std_init=0.4,
                      factorised_noise=True):
    k_wmu, k_bmu, k_ein, k_eout, k_wf, k_bf = jax.random.split(key, 6)
    mu_range = 1.0 / math.sqrt(in_features)

    p = dict(
        weight_mu=jax.random.uniform(
            k_wmu, (out_features, in_features), jnp.float32,
            -mu_range, mu_range),
        weight_sigma=jnp.full((out_features, in_features),
                              std_init / math.sqrt(in_features), jnp.float32),
        bias_mu=jax.random.uniform(
            k_bmu, (out_features,), jnp.float32, -mu_range, mu_range),
        bias_sigma=jnp.full((out_features,),
                            std_init / math.sqrt(out_features), jnp.float32),
    )
    if factorised_noise:
        eps_in = _scale_noise(k_ein, in_features)
        eps_out = _scale_noise(k_eout, out_features)
        p["eps_in"] = eps_in
        p["eps_out"] = eps_out
        p["bias_epsilon"] = eps_out
    else:
        p["weight_epsilon"] = jax.random.normal(
            k_wf, (out_features, in_features), jnp.float32)
        p["bias_epsilon"] = jax.random.normal(
            k_bf, (out_features,), jnp.float32)
    return p


# --------------------------------- main -------------------------------------

if __name__ == "__main__":
    key = jax.random.PRNGKey(0)
    k_pf, k_pi, k_x = jax.random.split(key, 3)

    batch, in_features, out_features = 8, 32, 64
    params_f = init_noisy_linear(k_pf, in_features, out_features,
                                 factorised_noise=True)
    params_i = init_noisy_linear(k_pi, in_features, out_features,
                                 factorised_noise=False)
    x = jax.random.normal(k_x, (batch, in_features), dtype=jnp.float32)

    # Pad / pack the parameters ONCE, outside the forward.
    prep_fact = prepare_noisy_linear_params(params_f)
    prep_full = prepare_noisy_linear_params(params_i)
    prep_fact_bf16 = prepare_noisy_linear_params(params_f,
                                                 weight_dtype=jnp.bfloat16)

    y_fact = jax.block_until_ready(
        noisy_linear_forward(x, prep_fact, training=True))
    y_full = jax.block_until_ready(
        noisy_linear_forward(x, prep_full, training=True))
    y_eval = jax.block_until_ready(
        noisy_linear_forward(x, prep_fact, training=False))
    y_bf16 = jax.block_until_ready(
        noisy_linear_forward(x, prep_fact_bf16, training=True))

    # Pure-JAX references.
    w_eff_f = (params_f["weight_mu"] + params_f["weight_sigma"]
               * jnp.outer(params_f["eps_out"], params_f["eps_in"]))
    b_eff_f = (params_f["bias_mu"]
               + params_f["bias_sigma"] * params_f["bias_epsilon"])
    ref_fact = x @ w_eff_f.T + b_eff_f

    w_eff_i = (params_i["weight_mu"]
               + params_i["weight_sigma"] * params_i["weight_epsilon"])
    b_eff_i = (params_i["bias_mu"]
               + params_i["bias_sigma"] * params_i["bias_epsilon"])
    ref_full = x @ w_eff_i.T + b_eff_i

    ref_eval = x @ params_f["weight_mu"].T + params_f["bias_mu"]

    assert y_fact.shape == (batch, out_features)
    assert y_eval.shape == (batch, out_features)
    assert jnp.allclose(y_fact, ref_fact, atol=1e-5, rtol=1e-5)
    assert jnp.allclose(y_full, ref_full, atol=1e-5, rtol=1e-5)
    assert jnp.allclose(y_eval, ref_eval, atol=1e-5, rtol=1e-5)
    # bf16 weight-streaming path: relaxed tolerance (half-precision weights).
    assert jnp.allclose(y_bf16, ref_fact, atol=5e-2, rtol=5e-2)

    print("KERNEL_OK")
</pallas_src>

<mosaic_0001>
module attributes {stable_mosaic.version = 11 : i64} {
  func.func @_train_fact_kernel(%arg0: i32, %arg1: i32, %arg2: i32, %arg3: memref<8x128xf32, #tpu.memory_space<vmem>>, %arg4: memref<128x128xf32, #tpu.memory_space<vmem>>, %arg5: memref<128x128xf32, #tpu.memory_space<vmem>>, %arg6: memref<128x1xf32, #tpu.memory_space<vmem>>, %arg7: memref<1x128xf32, #tpu.memory_space<vmem>>, %arg8: memref<1x128xf32, #tpu.memory_space<vmem>>, %arg9: memref<1x128xf32, #tpu.memory_space<vmem>>, %arg10: memref<1x128xf32, #tpu.memory_space<vmem>>, %arg11: memref<8x128xf32, #tpu.memory_space<vmem>>, %arg12: memref<8x128xf32, #tpu.memory_space<vmem>>) attributes {dimension_semantics = [#tpu.dimension_semantics<parallel>, #tpu.dimension_semantics<parallel>, #tpu.dimension_semantics<arbitrary>], iteration_bounds = array<i64: 1, 1, 1>, scalar_prefetch = 0 : i64, scratch_operands = 1 : i64, tpu.core_type = #tpu.core_type<tc>, window_params = [{transform_indices = @transform_0, window_bounds = array<i64: 8, 128>}, {transform_indices = @transform_1, window_bounds = array<i64: 128, 128>}, {transform_indices = @transform_2, window_bounds = array<i64: 128, 128>}, {transform_indices = @transform_3, window_bounds = array<i64: 128, 1>}, {transform_indices = @transform_4, window_bounds = array<i64: 1, 128>}, {transform_indices = @transform_5, window_bounds = array<i64: 1, 128>}, {transform_indices = @transform_6, window_bounds = array<i64: 1, 128>}, {transform_indices = @transform_7, window_bounds = array<i64: 1, 128>}, {transform_indices = @transform_8, window_bounds = array<i64: 8, 128>}]} {
    %c0_i32 = arith.constant 0 : i32
    %0 = arith.cmpi eq, %arg2, %c0_i32 : i32
    %1 = arith.extui %0 : i1 to i32
    %c0_i32_0 = arith.constant 0 : i32
    %2 = arith.cmpi ne, %1, %c0_i32_0 : i32
    scf.if %2 {
      %cst_16 = arith.constant 0.000000e+00 : f32
      %20 = vector.broadcast %cst_16 : f32 to vector<8x128xf32>
      %c0_17 = arith.constant 0 : index
      %c0_18 = arith.constant 0 : index
      %21 = vector.load %arg12[%c0_17, %c0_18] : memref<8x128xf32, #tpu.memory_space<vmem>>, vector<8x128xf32>
      tpu.vector_store %arg12[%c0_17, %c0_18], %20 {strides = array<i32>} : memref<8x128xf32, #tpu.memory_space<vmem>>, vector<8x128xf32>,
    } else {
    }
    %c0 = arith.constant 0 : index
    %c0_1 = arith.constant 0 : index
    %3 = vector.load %arg6[%c0, %c0_1] : memref<128x1xf32, #tpu.memory_space<vmem>>, vector<128x1xf32>
    %c0_2 = arith.constant 0 : index
    %c0_3 = arith.constant 0 : index
    %4 = vector.load %arg7[%c0_2, %c0_3] : memref<1x128xf32, #tpu.memory_space<vmem>>, vector<1x128xf32>
    %5 = vector.broadcast %3 : vector<128x1xf32> to vector<128x128xf32>
    %6 = vector.broadcast %4 : vector<1x128xf32> to vector<128x128xf32>
    %7 = arith.mulf %5, %6 : vector<128x128xf32>
    %c0_4 = arith.constant 0 : index
    %c0_5 = arith.constant 0 : index
    %8 = vector.load %arg4[%c0_4, %c0_5] : memref<128x128xf32, #tpu.memory_space<vmem>>, vector<128x128xf32>
    %c0_6 = arith.constant 0 : index
    %c0_7 = arith.constant 0 : index
    %9 = vector.load %arg5[%c0_6, %c0_7] : memref<128x128xf32, #tpu.memory_space<vmem>>, vector<128x128xf32>
    %10 = arith.mulf %9, %7 : vector<128x128xf32>
    %11 = arith.addf %8, %10 : vector<128x128xf32>
    %c0_8 = arith.constant 0 : index
    %c0_9 = arith.constant 0 : index
    %12 = vector.load %arg12[%c0_8, %c0_9] : memref<8x128xf32, #tpu.memory_space<vmem>>, vector<8x128xf32>
    %c0_10 = arith.constant 0 : index
    %c0_11 = arith.constant 0 : index
    %13 = vector.load %arg3[%c0_10, %c0_11] : memref<8x128xf32, #tpu.memory_space<vmem>>, vector<8x128xf32>
    %cst = arith.constant dense<0.000000e+00> : vector<8x128xf32>
    %14 = tpu.matmul %13, %11, %cst {dimension_numbers = #tpu.dot_dimension_numbers<[1], [1], [0], [0], [0, 0, 1, 0], [], []>} : vector<8x128xf32>, vector<128x128xf32>, vector<8x128xf32> -> vector<8x128xf32>
    %15 = arith.addf %12, %14 : vector<8x128xf32>
    %c0_12 = arith.constant 0 : index
    %c0_13 = arith.constant 0 : index
    %16 = vector.load %arg12[%c0_12, %c0_13] : memref<8x128xf32, #tpu.memory_space<vmem>>, vector<8x128xf32>
    tpu.vector_store %arg12[%c0_12, %c0_13], %15 {strides = array<i32>} : memref<8x128xf32, #tpu.memory_space<vmem>>, vector<8x128xf32>,
    %c0_i32_14 = arith.constant 0 : i32
    %17 = arith.cmpi eq, %arg2, %c0_i32_14 : i32
    %18 = arith.extui %17 : i1 to i32
    %c0_i32_15 = arith.constant 0 : i32
    %19 = arith.cmpi ne, %18, %c0_i32_15 : i32
    scf.if %19 {
      %c0_16 = arith.constant 0 : index
      %c0_17 = arith.constant 0 : index
      %20 = vector.load %arg8[%c0_16, %c0_17] : memref<1x128xf32, #tpu.memory_space<vmem>>, vector<1x128xf32>
      %c0_18 = arith.constant 0 : index
      %c0_19 = arith.constant 0 : index
      %21 = vector.load %arg9[%c0_18, %c0_19] : memref<1x128xf32, #tpu.memory_space<vmem>>, vector<1x128xf32>
      %c0_20 = arith.constant 0 : index
      %c0_21 = arith.constant 0 : index
      %22 = vector.load %arg10[%c0_20, %c0_21] : memref<1x128xf32, #tpu.memory_space<vmem>>, vector<1x128xf32>
      %23 = arith.mulf %21, %22 : vector<1x128xf32>
      %24 = arith.addf %20, %23 : vector<1x128xf32>
      %c0_22 = arith.constant 0 : index
      %c0_23 = arith.constant 0 : index
      %25 = vector.load %arg12[%c0_22, %c0_23] : memref<8x128xf32, #tpu.memory_space<vmem>>, vector<8x128xf32>
      %26 = vector.broadcast %24 : vector<1x128xf32> to vector<8x128xf32>
      %27 = arith.addf %25, %26 : vector<8x128xf32>
      %c0_24 = arith.constant 0 : index
      %c0_25 = arith.constant 0 : index
      %28 = vector.load %arg11[%c0_24, %c0_25] : memref<8x128xf32, #tpu.memory_space<vmem>>, vector<8x128xf32>
      tpu.vector_store %arg11[%c0_24, %c0_25], %27 {strides = array<i32>} : memref<8x128xf32, #tpu.memory_space<vmem>>, vector<8x128xf32>,
    } else {
    }
    return
  }
  func.func @transform_0(%arg0: i32, %arg1: i32, %arg2: i32) -> (i32, i32) {
    %c0_i32 = arith.constant 0 : i32
    return %arg0, %arg2 : i32, i32
  }
  func.func @transform_1(%arg0: i32, %arg1: i32, %arg2: i32) -> (i32, i32) {
    %c0_i32 = arith.constant 0 : i32
    return %arg1, %arg2 : i32, i32
  }
  func.func @transform_2(%arg0: i32, %arg1: i32, %arg2: i32) -> (i32, i32) {
    %c0_i32 = arith.constant 0 : i32
    return %arg1, %arg2 : i32, i32
  }
  func.func @transform_3(%arg0: i32, %arg1: i32, %arg2: i32) -> (i32, i32) {
    %c0_i32 = arith.constant 0 : i32
    %c0_i32_0 = arith.constant 0 : i32
    return %arg1, %c0_i32 : i32, i32
  }
  func.func @transform_4(%arg0: i32, %arg1: i32, %arg2: i32) -> (i32, i32) {
    %c0_i32 = arith.constant 0 : i32
    %c0_i32_0 = arith.constant 0 : i32
    return %c0_i32, %arg2 : i32, i32
  }
  func.func @transform_5(%arg0: i32, %arg1: i32, %arg2: i32) -> (i32, i32) {
    %c0_i32 = arith.constant 0 : i32
    %c0_i32_0 = arith.constant 0 : i32
    return %c0_i32, %arg1 : i32, i32
  }
  func.func @transform_6(%arg0: i32, %arg1: i32, %arg2: i32) -> (i32, i32) {
    %c0_i32 = arith.constant 0 : i32
    %c0_i32_0 = arith.constant 0 : i32
    return %c0_i32, %arg1 : i32, i32
  }
  func.func @transform_7(%arg0: i32, %arg1: i32, %arg2: i32) -> (i32, i32) {
    %c0_i32 = arith.constant 0 : i32
    %c0_i32_0 = arith.constant 0 : i32
    return %c0_i32, %arg1 : i32, i32
  }
  func.func @transform_8(%arg0: i32, %arg1: i32, %arg2: i32) -> (i32, i32) {
    %c0_i32 = arith.constant 0 : i32
    return %arg0, %arg1 : i32, i32
  }
}

</mosaic_0001>

<llo_original>
// kernel: tpu_custom_call.1
$region0: #{tpu_custom_call.1}
  #allocation0 [shape = 'u32[]', space=smem, size = 0x4, offset = 0x4, fixed_abs, tag = 'smem constant byte address 0x4 - core index']
  #allocation1 [shape = 'u32[144,128]{1,0:T(1,128)}', space=vmem, size = 0x12000, scoped, tag = 'internal scratch']
  #allocation2 [shape = 'f32[8,128]{1,0:T(8,128)}', space=vmem, size = 0x1000, scoped, tag = 'scratch operand']
  %s0 = inlined_call_operand.hbm [shape: f32[8,128], index: 0, kind: input, shape index: {}]
  %s1 = inlined_call_operand.vmem [shape: f32[128,128], index: 1, kind: input, shape index: {}]
  %s2 = inlined_call_operand.hbm [shape: f32[128,128], index: 2, kind: input, shape index: {}]
  %s3 = inlined_call_operand.vmem [shape: f32[128,1], index: 3, kind: input, shape index: {}]
  %s4 = inlined_call_operand.vmem [shape: f32[1,128], index: 4, kind: input, shape index: {}]
  %s5 = inlined_call_operand.vmem [shape: f32[1,128], index: 5, kind: input, shape index: {}]
  %s6 = inlined_call_operand.vmem [shape: f32[1,128], index: 6, kind: input, shape index: {}]
  %s7 = inlined_call_operand.vmem [shape: f32[1,128], index: 7, kind: input, shape index: {}]
  %s8 = inlined_call_operand.hbm [shape: f32[8,128], index: 8, kind: output, shape index: {}]
  %s9 = sld [smem:[#allocation0]]
  $region58: #{tpu_custom_call.1} parent=0
    _
  %s11 = ssub.s32 1, %s9
  %s12 = scalar_select 0, %s11, %s9
  $region1: #{tpu_custom_call.1} parent=0
    #allocation3 [shape = 'u8[4096]{0}', space=vmem, size = 0x1000, scoped, tag = 'input window, operand 0, single buffered']
    #allocation4 [shape = 's32[1]{0}', space=sflag, size = 0x4, scoped, tag = 'scoped memory for tpu_custom_call.1']
    #allocation5 [shape = 's32[1]{0}', space=sflag, size = 0x4, scoped, tag = 'scoped memory for tpu_custom_call.1']
    #allocation6 [shape = 'u8[65536]{0}', space=vmem, size = 0x10000, scoped, tag = 'input window, operand 2, single buffered']
    #allocation7 [shape = 's32[1]{0}', space=sflag, size = 0x4, scoped, tag = 'scoped memory for tpu_custom_call.1']
    #allocation8 [shape = 'u8[4096]{0}', space=vmem, size = 0x1000, scoped, tag = 'output window, operand 0, single buffered']
    %13 = vsyncpa [#allocation4], 0
    %14 = vsyncpa [#allocation7], 0
    %15 = vsyncpa [#allocation5], 0
    // Predicated region
    $region2: #{tpu_custom_call.1} parent=1 // pred_check
      _
    $region3: #{tpu_custom_call.1} parent=1 // pred_check_branch
      %17 = sbr.rel (0) target = $region5
    $region4: #{tpu_custom_call.1} parent=1 // pred_region
      %s19 = ssub.s32 128, 128
      %20 = vsyncadd [#allocation4], %s19
      %s22 = sshll.u32 [#allocation3], 4
      %s23 = int_to_ptr.vmem [resolvable:$true] %s22
      %25 = dma.hbm_to_vmem [thread:$0]  %s0, 128, %s23, [#allocation4]
    $region5: #{tpu_custom_call.1} parent=1 // pred_fallthru
      _
    // Predicated region
    $region6: #{tpu_custom_call.1} parent=1 // pred_check
      _
    $region7: #{tpu_custom_call.1} parent=1 // pred_check_branch
      %27 = sbr.rel (0) target = $region9
    $region8: #{tpu_custom_call.1} parent=1 // pred_region
      _
    $region9: #{tpu_custom_call.1} parent=1 // pred_fallthru
      _
    // Predicated region
    $region10: #{tpu_custom_call.1} parent=1 // pred_check
      _
    $region11: #{tpu_custom_call.1} parent=1 // pred_check_branch
      %29 = sbr.rel (0) target = $region13
    $region12: #{tpu_custom_call.1} parent=1 // pred_region
      %s31 = ssub.s32 2048, 2048
      %32 = vsyncadd [#allocation7], %s31
      %s33 = sshll.u32 [#allocation6], 4
      %s34 = int_to_ptr.vmem [resolvable:$true] %s33
      %39 = dma.hbm_to_vmem [thread:$0]  %s2, 2048, %s34, [#allocation7], 128, 128, 8
    $region13: #{tpu_custom_call.1} parent=1 // pred_fallthru
      _
    // Predicated region
    $region14: #{tpu_custom_call.1} parent=1 // pred_check
      _
    $region15: #{tpu_custom_call.1} parent=1 // pred_check_branch
      %41 = sbr.rel (0) target = $region17
    $region16: #{tpu_custom_call.1} parent=1 // pred_region
      _
    $region17: #{tpu_custom_call.1} parent=1 // pred_fallthru
      _
    // Predicated region
    $region18: #{tpu_custom_call.1} parent=1 // pred_check
      _
    $region19: #{tpu_custom_call.1} parent=1 // pred_check_branch
      %43 = sbr.rel (0) target = $region21
    $region20: #{tpu_custom_call.1} parent=1 // pred_region
      _
    $region21: #{tpu_custom_call.1} parent=1 // pred_fallthru
      _
    // Predicated region
    $region22: #{tpu_custom_call.1} parent=1 // pred_check
      _
    $region23: #{tpu_custom_call.1} parent=1 // pred_check_branch
      %45 = sbr.rel (0) target = $region25
    $region24: #{tpu_custom_call.1} parent=1 // pred_region
      _
    $region25: #{tpu_custom_call.1} parent=1 // pred_fallthru
      _
    // Predicated region
    $region26: #{tpu_custom_call.1} parent=1 // pred_check
      _
    $region27: #{tpu_custom_call.1} parent=1 // pred_check_branch
      %47 = sbr.rel (0) target = $region29
    $region28: #{tpu_custom_call.1} parent=1 // pred_region
      _
    $region29: #{tpu_custom_call.1} parent=1 // pred_fallthru
      _
    // Predicated region
    $region30: #{tpu_custom_call.1} parent=1 // pred_check
      _
    $region31: #{tpu_custom_call.1} parent=1 // pred_check_branch
      %49 = sbr.rel (0) target = $region33
    $region32: #{tpu_custom_call.1} parent=1 // pred_region
      _
    $region33: #{tpu_custom_call.1} parent=1 // pred_fallthru
      _
    // Predicated region
    $region34: #{tpu_custom_call.1} parent=1 // pred_check
      _
    $region35: #{tpu_custom_call.1} parent=1 // pred_check_branch
      %51 = sbr.rel (0) target = $region37
    $region36: #{tpu_custom_call.1} parent=1 // pred_region
      %52 = dma.done [#allocation4], 128
    $region37: #{tpu_custom_call.1} parent=1 // pred_fallthru
      _
    // Predicated region
    $region38: #{tpu_custom_call.1} parent=1 // pred_check
      _
    $region39: #{tpu_custom_call.1} parent=1 // pred_check_branch
      %54 = sbr.rel (0) target = $region41
    $region40: #{tpu_custom_call.1} parent=1 // pred_region
      %55 = dma.done [#allocation7], 2048
    $region41: #{tpu_custom_call.1} parent=1 // pred_fallthru
      _
    %p56 = scmp.eq.s32.totalorder 0, 0
    // Predicated region
    $region42: #{tpu_custom_call.1} parent=1 // pred_check
      %p57 = pneg %p56
    $region43: #{tpu_custom_call.1} parent=1 // pred_check_branch
      %59 = sbr.rel (%p57) target = $region45
    $region44: #{tpu_custom_call.1} parent=1 // pred_region
      %60 = vst [vmem:[#allocation2] sm:$0xff] 0.0
    $region45: #{tpu_custom_call.1} parent=1 // pred_fallthru
      _
    %v61 = vld [vmem:[%s3] sm:$0xff]
    %v62 = vld [vmem:[%s3 + $0x8] sm:$0xff]
    %v63 = vld [vmem:[%s3 + $0x10] sm:$0xff]
    %v64 = vld [vmem:[%s3 + $0x18] sm:$0xff]
    %v65 = vld [vmem:[%s3 + $0x20] sm:$0xff]
    %v66 = vld [vmem:[%s3 + $0x28] sm:$0xff]
    %v67 = vld [vmem:[%s3 + $0x30] sm:$0xff]
    %v68 = vld [vmem:[%s3 + $0x38] sm:$0xff]
    %v69 = vld [vmem:[%s3 + $0x40] sm:$0xff]
    %v70 = vld [vmem:[%s3 + $0x48] sm:$0xff]
    %v71 = vld [vmem:[%s3 + $0x50] sm:$0xff]
    %v72 = vld [vmem:[%s3 + $0x58] sm:$0xff]
    %v73 = vld [vmem:[%s3 + $0x60] sm:$0xff]
    %v74 = vld [vmem:[%s3 + $0x68] sm:$0xff]
    %v75 = vld [vmem:[%s3 + $0x70] sm:$0xff]
    %v76 = vld [vmem:[%s3 + $0x78] sm:$0xff]
    %v77 = vld [vmem:[%s4] sm:$0x1]
    %79 = vset.pattern.permute.xlu0 0
    %80 = vperm.xlu0 %79, %v61
    %v81 = vpop.permute.xlu0 %80
    %84 = vset.pattern.permute.xlu0 0
    %85 = vperm.xlu0 %84, %v62
    %v86 = vpop.permute.xlu0 %85
    %89 = vset.pattern.permute.xlu0 0
    %90 = vperm.xlu0 %89, %v63
    %v91 = vpop.permute.xlu0 %90
    %94 = vset.pattern.permute.xlu0 0
    %95 = vperm.xlu0 %94, %v64
    %v96 = vpop.permute.xlu0 %95
    %99 = vset.pattern.permute.xlu0 0
    %100 = vperm.xlu0 %99, %v65
    %v101 = vpop.permute.xlu0 %100
    %104 = vset.pattern.permute.xlu0 0
    %105 = vperm.xlu0 %104, %v66
    %v106 = vpop.permute.xlu0 %105
    %109 = vset.pattern.permute.xlu0 0
    %110 = vperm.xlu0 %109, %v67
    %v111 = vpop.permute.xlu0 %110
    %114 = vset.pattern.permute.xlu0 0
    %115 = vperm.xlu0 %114, %v68
    %v116 = vpop.permute.xlu0 %115
    %119 = vset.pattern.permute.xlu0 0
    %120 = vperm.xlu0 %119, %v69
    %v121 = vpop.permute.xlu0 %120
    %124 = vset.pattern.permute.xlu0 0
    %125 = vperm.xlu0 %124, %v70
    %v126 = vpop.permute.xlu0 %125
    %129 = vset.pattern.permute.xlu0 0
    %130 = vperm.xlu0 %129, %v71
    %v131 = vpop.permute.xlu0 %130
    %134 = vset.pattern.permute.xlu0 0
    %135 = vperm.xlu0 %134, %v72
    %v136 = vpop.permute.xlu0 %135
    %139 = vset.pattern.permute.xlu0 0
    %140 = vperm.xlu0 %139, %v73
    %v141 = vpop.permute.xlu0 %140
    %144 = vset.pattern.permute.xlu0 0
    %145 = vperm.xlu0 %144, %v74
    %v146 = vpop.permute.xlu0 %145
    %149 = vset.pattern.permute.xlu0 0
    %150 = vperm.xlu0 %149, %v75
    %v151 = vpop.permute.xlu0 %150
    %154 = vset.pattern.permute.xlu0 0
    %155 = vperm.xlu0 %154, %v76
    %v156 = vpop.permute.xlu0 %155
    %v159 = vlaneseq
    %v160 = vshrl.u32 %v159, 7
    %v161 = vsub.s32 0, %v160
    %v162 = vrot.slane %v77, %v161
    %v164 = vmul.f32 %v81, %v162
    %v165 = vmul.f32 %v86, %v162
    %v166 = vmul.f32 %v91, %v162
    %v167 = vmul.f32 %v96, %v162
    %v168 = vmul.f32 %v101, %v162
    %v169 = vmul.f32 %v106, %v162
    %v170 = vmul.f32 %v111, %v162
    %v171 = vmul.f32 %v116, %v162
    %v172 = vmul.f32 %v121, %v162
    %v173 = vmul.f32 %v126, %v162
    %v174 = vmul.f32 %v131, %v162
    %v175 = vmul.f32 %v136, %v162
    %v176 = vmul.f32 %v141, %v162
    %v177 = vmul.f32 %v146, %v162
    %v178 = vmul.f32 %v151, %v162
    %v179 = vmul.f32 %v156, %v162
    %v180 = vld [vmem:[%s1] sm:$0xff]
    %v181 = vld [vmem:[%s1 + $0x8] sm:$0xff]
    %v182 = vld [vmem:[%s1 + $0x10] sm:$0xff]
    %v183 = vld [vmem:[%s1 + $0x18] sm:$0xff]
    %v184 = vld [vmem:[%s1 + $0x20] sm:$0xff]
    %v185 = vld [vmem:[%s1 + $0x28] sm:$0xff]
    %v186 = vld [vmem:[%s1 + $0x30] sm:$0xff]
    %v187 = vld [vmem:[%s1 + $0x38] sm:$0xff]
    %v188 = vld [vmem:[%s1 + $0x40] sm:$0xff]
    %v189 = vld [vmem:[%s1 + $0x48] sm:$0xff]
    %v190 = vld [vmem:[%s1 + $0x50] sm:$0xff]
    %v191 = vld [vmem:[%s1 + $0x58] sm:$0xff]
    %v192 = vld [vmem:[%s1 + $0x60] sm:$0xff]
    %v193 = vld [vmem:[%s1 + $0x68] sm:$0xff]
    %v194 = vld [vmem:[%s1 + $0x70] sm:$0xff]
    %v195 = vld [vmem:[%s1 + $0x78] sm:$0xff]
    %v196 = vld [vmem:[#allocation6] sm:$0xff]
    %v197 = vld [vmem:[#allocation6 + $0x8] sm:$0xff]
    %v198 = vld [vmem:[#allocation6 + $0x10] sm:$0xff]
    %v199 = vld [vmem:[#allocation6 + $0x18] sm:$0xff]
    %v200 = vld [vmem:[#allocation6 + $0x20] sm:$0xff]
    %v201 = vld [vmem:[#allocation6 + $0x28] sm:$0xff]
    %v202 = vld [vmem:[#allocation6 + $0x30] sm:$0xff]
    %v203 = vld [vmem:[#allocation6 + $0x38] sm:$0xff]
    %v204 = vld [vmem:[#allocation6 + $0x40] sm:$0xff]
    %v205 = vld [vmem:[#allocation6 + $0x48] sm:$0xff]
    %v206 = vld [vmem:[#allocation6 + $0x50] sm:$0xff]
    %v207 = vld [vmem:[#allocation6 + $0x58] sm:$0xff]
    %v208 = vld [vmem:[#allocation6 + $0x60] sm:$0xff]
    %v209 = vld [vmem:[#allocation6 + $0x68] sm:$0xff]
    %v210 = vld [vmem:[#allocation6 + $0x70] sm:$0xff]
    %v211 = vld [vmem:[#allocation6 + $0x78] sm:$0xff]
    %v212 = vmul.f32 %v196, %v164
    %v213 = vmul.f32 %v197, %v165
    %v214 = vmul.f32 %v198, %v166
    %v215 = vmul.f32 %v199, %v167
    %v216 = vmul.f32 %v200, %v168
    %v217 = vmul.f32 %v201, %v169
    %v218 = vmul.f32 %v202, %v170
    %v219 = vmul.f32 %v203, %v171
    %v220 = vmul.f32 %v204, %v172
    %v221 = vmul.f32 %v205, %v173
    %v222 = vmul.f32 %v206, %v174
    %v223 = vmul.f32 %v207, %v175
    %v224 = vmul.f32 %v208, %v176
    %v225 = vmul.f32 %v209, %v177
    %v226 = vmul.f32 %v210, %v178
    %v227 = vmul.f32 %v211, %v179
    %v228 = vadd.f32 %v180, %v212
    %v229 = vadd.f32 %v181, %v213
    %v230 = vadd.f32 %v182, %v214
    %v231 = vadd.f32 %v183, %v215
    %v232 = vadd.f32 %v184, %v216
    %v233 = vadd.f32 %v185, %v217
    %v234 = vadd.f32 %v186, %v218
    %v235 = vadd.f32 %v187, %v219
    %v236 = vadd.f32 %v188, %v220
    %v237 = vadd.f32 %v189, %v221
    %v238 = vadd.f32 %v190, %v222
    %v239 = vadd.f32 %v191, %v223
    %v240 = vadd.f32 %v192, %v224
    %v241 = vadd.f32 %v193, %v225
    %v242 = vadd.f32 %v194, %v226
    %v243 = vadd.f32 %v195, %v227
    %v244 = vld [vmem:[#allocation2] sm:$0xff]
    %v245 = vld [vmem:[#allocation3] sm:$0xff]
    %246 = vmatprep.subr.mxu0 0.0
    %247 = vmatpush1.xpose.msra.mxu0 %v228
    %248 = vmatprep.subr.mxu0 0.0
    %249 = vmatpush1.xpose.msra.mxu0 %v229
    %250 = vmatprep.subr.mxu0 0.0
    %251 = vmatpush1.xpose.msra.mxu0 %v230
    %252 = vmatprep.subr.mxu0 0.0
    %253 = vmatpush1.xpose.msra.mxu0 %v231
    %254 = vmatprep.subr.mxu0 0.0
    %255 = vmatpush1.xpose.msra.mxu0 %v232
    %256 = vmatprep.subr.mxu0 0.0
    %257 = vmatpush1.xpose.msra.mxu0 %v233
    %258 = vmatprep.subr.mxu0 0.0
    %259 = vmatpush1.xpose.msra.mxu0 %v234
    %260 = vmatprep.subr.mxu0 0.0
    %261 = vmatpush1.xpose.msra.mxu0 %v235
    %262 = vmatprep.subr.mxu0 0.0
    %263 = vmatpush1.xpose.msra.mxu0 %v236
    %264 = vmatprep.subr.mxu0 0.0
    %265 = vmatpush1.xpose.msra.mxu0 %v237
    %266 = vmatprep.subr.mxu0 0.0
    %267 = vmatpush1.xpose.msra.mxu0 %v238
    %268 = vmatprep.subr.mxu0 0.0
    %269 = vmatpush1.xpose.msra.mxu0 %v239
    %270 = vmatprep.subr.mxu0 0.0
    %271 = vmatpush1.xpose.msra.mxu0 %v240
    %272 = vmatprep.subr.mxu0 0.0
    %273 = vmatpush1.xpose.msra.mxu0 %v241
    %274 = vmatprep.subr.mxu0 0.0
    %275 = vmatpush1.xpose.msra.mxu0 %v242
    %276 = vmatprep.subr.mxu0 0.0
    %277 = vmatpush1.xpose.msra.mxu0 %v243
    %278 = vmatprep.subr.mxu0 0.0
    %279 = vmatpush1.xpose.msra.mxu0 0.0
    %280 = vmatprep.subr.mxu0 0.0
    %281 = vmatpush1.xpose.msra.mxu0 0.0
    %282 = vmatprep.subr.mxu0 0.0
    %283 = vmatpush1.xpose.msra.mxu0 0.0
    %284 = vmatprep.subr.mxu0 0.0
    %285 = vmatpush1.xpose.msra.mxu0 0.0
    %286 = vmatprep.subr.mxu0 0.0
    %287 = vmatpush1.xpose.msra.mxu0 0.0
    %288 = vmatprep.subr.mxu0 0.0
    %289 = vmatpush1.xpose.msra.mxu0 0.0
    %290 = vmatprep.subr.mxu0 0.0
    %291 = vmatpush1.xpose.msra.mxu0 0.0
    %292 = vmatprep.subr.mxu0 0.0
    %293 = vmatpush1.xpose.msra.mxu0 0.0
    %294 = vmatprep.subr.mxu0 0.0
    %295 = vmatpush1.xpose.msra.mxu0 0.0
    %296 = vmatprep.subr.mxu0 0.0
    %297 = vmatpush1.xpose.msra.mxu0 0.0
    %298 = vmatprep.subr.mxu0 0.0
    %299 = vmatpush1.xpose.msra.mxu0 0.0
    %300 = vmatprep.subr.mxu0 0.0
    %301 = vmatpush1.xpose.msra.mxu0 0.0
    %302 = vmatprep.subr.mxu0 0.0
    %303 = vmatpush1.xpose.msra.mxu0 0.0
    %304 = vmatprep.subr.mxu0 0.0
    %305 = vmatpush1.xpose.msra.mxu0 0.0
    %306 = vmatprep.subr.mxu0 0.0
    %307 = vmatpush1.xpose.msra.mxu0 0.0
    %308 = vmatprep.subr.mxu0 0.0
    %309 = vmatpush1.xpose.msra.mxu0 0.0
    %310 = vmatprep.mubr.f32.mxu0 0.0
    %311 = vmatmul.mubr.f32.gmra.mrb[0].mxu0 %v245
    %v312 = vpop.f32.mrb[0].mxu0
    %v313 = vadd.f32 0.0, %v312
    %v314 = vpop.f32.mrb[0].mxu0
    %315 = vdwg.mxu0
    %v316 = vadd.f32 %v244, %v313
    %317 = vst [vmem:[#allocation2] sm:$0xff] %v316
    // Predicated region
    $region46: #{tpu_custom_call.1} parent=1 // pred_check
      %p318 = pneg %p56
    $region47: #{tpu_custom_call.1} parent=1 // pred_check_branch
      %320 = sbr.rel (%p318) target = $region49
    $region48: #{tpu_custom_call.1} parent=1 // pred_region
      %v321 = vld [vmem:[%s5] sm:$0x1]
      %v322 = vld [vmem:[%s6] sm:$0x1]
      %v323 = vld [vmem:[%s7] sm:$0x1]
      %v324 = vmul.f32 %v322, %v323
      %v325 = vadd.f32 %v321, %v324
      %v326 = vld [vmem:[#allocation2] sm:$0xff]
      %v328 = vlaneseq
      %v329 = vshrl.u32 %v328, 7
      %v330 = vsub.s32 0, %v329
      %v331 = vrot.slane %v325, %v330
      %v333 = vadd.f32 %v326, %v331
      %334 = vst [vmem:[#allocation8] sm:$0xff] %v333
    $region49: #{tpu_custom_call.1} parent=1 // pred_fallthru
      _
    // Predicated region
    $region50: #{tpu_custom_call.1} parent=1 // pred_check
      _
    $region51: #{tpu_custom_call.1} parent=1 // pred_check_branch
      %336 = sbr.rel (0) target = $region53
    $region52: #{tpu_custom_call.1} parent=1 // pred_region
      %s338 = ssub.s32 128, 128
      %339 = vsyncadd [#allocation5], %s338
      %s341 = sshll.u32 [#allocation8], 4
      %s342 = int_to_ptr.vmem [resolvable:$true] %s341
      %344 = dma.vmem_to_hbm [thread:$0]  %s342, 128, %s8, [#allocation5]
    $region53: #{tpu_custom_call.1} parent=1 // pred_fallthru
      _
    // Predicated region
    $region54: #{tpu_custom_call.1} parent=1 // pred_check
      _
    $region55: #{tpu_custom_call.1} parent=1 // pred_check_branch
      %346 = sbr.rel (0) target = $region57
    $region56: #{tpu_custom_call.1} parent=1 // pred_region
      %347 = dma.done [#allocation5], 128
    $region57: #{tpu_custom_call.1} parent=1 // pred_fallthru
      _
    %348 = vsyncpa [#allocation4], 1
    %349 = vsyncpa [#allocation7], 1
    %350 = vsyncpa [#allocation5], 1

</llo_original>
